<compile_context>
chip_gen: v5e
topology: v5e:2x2
jax: 0.10.0
libtpu: 0.0.40
codegen_flags: <defaults>
</compile_context>

<pallas_src>
import functools

import jax
import jax.numpy as jnp
from jax.experimental import pallas as pl
from jax.experimental.pallas import tpu as pltpu

LANE = 128
SUBLANE = 8
# Above this resident-weight size, single-buffer the weight/bias (they never
# change block index, so double-buffering only doubles VMEM footprint).
_BIG_WEIGHT_BYTES = 4 << 20


def _round_up(x, m):
    return (x + m - 1) // m * m


def _decoder_kernel(x_ref, w_ref, b_ref, o_ref):
    # One batch tile: [tm, K](bf16) @ [K, N_pad](bf16) -> f32 on the MXU.
    logits = jnp.dot(x_ref[...], w_ref[...], preferred_element_type=jnp.float32)
    logits = logits + b_ref[...]  # bias add in f32 (v5e-safe VPU)
    # sigmoid(z) = 1 / (1 + exp(-z)); exp + approx reciprocal both go to the EUP.
    o_ref[...] = pl.reciprocal(1.0 + jnp.exp(-logits), approx=True)


def prepare_decoder_params(w, b):
    """One-time parameter prep (outside the hot path).

    Args:
      w: [in_dim, out_dim] float weight (pre-transposed nn.Linear weight).
      b: [out_dim] float bias.
    Returns:
      (w_p, b_p): bf16 weight [in_dim, N_pad], f32 bias [1, N_pad] with the
      lane axis zero-padded to a multiple of 128.
    """
    K, N = w.shape
    N_pad = _round_up(N, LANE)
    w_p = w.astype(jnp.bfloat16)
    b_p = b.reshape(1, -1).astype(jnp.float32)
    if N_pad != N:
        w_p = jnp.pad(w_p, ((0, 0), (0, N_pad - N)))
        b_p = jnp.pad(b_p, ((0, 0), (0, N_pad - N)))
    return w_p, b_p


@functools.partial(jax.jit, static_argnames=("out_dim", "tm"))
def decoder_forward(x, w_p, b_p, *, out_dim, tm=512):
    """Decoder forward: sigmoid(x @ w + b).

    Args:
      x: [B, in_dim] float32 activations.
      w_p: [in_dim, N_pad] bf16 weight from prepare_decoder_params.
      b_p: [1, N_pad] f32 bias from prepare_decoder_params.
      out_dim: true (unpadded) output width.
      tm: max batch tile size (rows per grid step).
    Returns:
      [B, out_dim] float32.
    """
    B, K = x.shape
    Kw, N_pad = w_p.shape
    assert K == Kw, "weight in_dim mismatch"
    assert N_pad % LANE == 0, "weight must be lane-padded (prepare_decoder_params)"

    # --- batch tile selection -------------------------------------------------
    B8 = _round_up(B, SUBLANE)
    tm = max(SUBLANE, _round_up(min(tm, B8), SUBLANE))
    if B8 >= 2 * SUBLANE:
        # Guarantee >= 2 grid steps so the "parallel" axis uses both v7x TCs.
        tm = min(tm, _round_up((B8 + 1) // 2, SUBLANE))
    B_pad = _round_up(B, tm)

    # --- batch-only padding of activations (no K pad), bf16 MXU inputs --------
    x_b = x.astype(jnp.bfloat16)
    if B_pad != B:
        x_b = jnp.pad(x_b, ((0, B_pad - B), (0, 0)))

    # --- VMEM budget -----------------------------------------------------------
    w_bytes = K * N_pad * 2          # bf16 resident weight
    b_bytes = N_pad * 4              # f32 resident bias
    x_tile_bytes = tm * K * 2        # bf16 activation tile
    o_tile_bytes = tm * N_pad * 4    # f32 output tile
    big_weight = w_bytes > _BIG_WEIGHT_BYTES
    w_bufs = 1 if big_weight else 2
    vmem_need = (w_bufs * (w_bytes + b_bytes)
                 + 2 * (x_tile_bytes + o_tile_bytes)
                 + (2 << 20))  # headroom for internal scratch
    vmem_limit = int(min(max(vmem_need, 16 << 20), 48 << 20))  # fits v7x's 64 MiB

    if big_weight:
        # Constant-index blocks: single-buffer to halve their VMEM footprint.
        w_spec = pl.BlockSpec((K, N_pad), lambda i: (0, 0),
                              pipeline_mode=pl.Buffered(1))
        b_spec = pl.BlockSpec((1, N_pad), lambda i: (0, 0),
                              pipeline_mode=pl.Buffered(1))
    else:
        w_spec = pl.BlockSpec((K, N_pad), lambda i: (0, 0))
        b_spec = pl.BlockSpec((1, N_pad), lambda i: (0, 0))

    out = pl.pallas_call(
        _decoder_kernel,
        out_shape=jax.ShapeDtypeStruct((B_pad, N_pad), jnp.float32),
        grid=(B_pad // tm,),
        in_specs=[
            pl.BlockSpec((tm, K), lambda i: (i, 0)),  # batch-tiled activations
            w_spec,                                   # weight resident across grid
            b_spec,                                   # bias resident across grid
        ],
        out_specs=pl.BlockSpec((tm, N_pad), lambda i: (i, 0)),
        compiler_params=pltpu.CompilerParams(
            dimension_semantics=("parallel",),        # shard batch across TCs (v7x)
            vmem_limit_bytes=vmem_limit,
        ),
    )(x_b, w_p, b_p)

    # Slice only when actually misaligned (avoids an extra copy of the output).
    if B_pad != B or N_pad != out_dim:
        out = out[:B, :out_dim]
    return out


if __name__ == "__main__":
    # Small shapes consistent with Decoder(in_dim, out_dim): x is [batch, in_dim].
    B, in_dim, out_dim = 64, 32, 16

    key = jax.random.PRNGKey(0)
    kx, kw, kb = jax.random.split(key, 3)
    x = jax.random.normal(kx, (B, in_dim), jnp.float32)

    # Deterministic nn.Linear-style init (bound = 1/sqrt(fan_in)), stored
    # pre-transposed as [in_dim, out_dim].
    bound = 1.0 / float(in_dim) ** 0.5
    w = jax.random.uniform(kw, (in_dim, out_dim), jnp.float32, -bound, bound)
    b = jax.random.uniform(kb, (out_dim,), jnp.float32, -bound, bound)

    # One-time parameter prep (padding/cast hoisted out of the hot path).
    w_p, b_p = prepare_decoder_params(w, b)

    # B=64 -> tm capped to 32 -> 2 grid steps (exercises pipelining + megacore path).
    y = decoder_forward(x, w_p, b_p, out_dim=out_dim)
    jax.block_until_ready(y)

    # Pure-JAX f32 reference; tolerance loosened for bf16 MXU inputs + approx recip.
    y_ref = jax.nn.sigmoid(x @ w + b)
    assert y.shape == (B, out_dim), f"bad shape {y.shape}"
    assert jnp.allclose(y, y_ref, atol=5e-3), "decoder output mismatch"

    print("KERNEL_OK")
</pallas_src>

<mosaic_0001>
module attributes {stable_mosaic.version = 11 : i64} {
  func.func @_decoder_kernel(%arg0: i32, %arg1: memref<32x32xbf16, #tpu.memory_space<vmem>>, %arg2: memref<32x128xbf16, #tpu.memory_space<vmem>>, %arg3: memref<1x128xf32, #tpu.memory_space<vmem>>, %arg4: memref<32x128xf32, #tpu.memory_space<vmem>>) attributes {dimension_semantics = [#tpu.dimension_semantics<parallel>], iteration_bounds = array<i64: 2>, scalar_prefetch = 0 : i64, scratch_operands = 0 : i64, tpu.core_type = #tpu.core_type<tc>, window_params = [{transform_indices = @transform_0, window_bounds = array<i64: 32, 32>}, {pipeline_mode = #tpu.pipeline_mode<synchronous>, transform_indices = @transform_1, window_bounds = array<i64: 32, 128>}, {pipeline_mode = #tpu.pipeline_mode<synchronous>, transform_indices = @transform_2, window_bounds = array<i64: 1, 128>}, {transform_indices = @transform_3, window_bounds = array<i64: 32, 128>}]} {
    %c0 = arith.constant 0 : index
    %c0_0 = arith.constant 0 : index
    %0 = vector.load %arg1[%c0, %c0_0] : memref<32x32xbf16, #tpu.memory_space<vmem>>, vector<32x32xbf16>
    %c0_1 = arith.constant 0 : index
    %c0_2 = arith.constant 0 : index
    %1 = vector.load %arg2[%c0_1, %c0_2] : memref<32x128xbf16, #tpu.memory_space<vmem>>, vector<32x128xbf16>
    %cst = arith.constant dense<0.000000e+00> : vector<32x128xf32>
    %2 = tpu.matmul %0, %1, %cst {dimension_numbers = #tpu.dot_dimension_numbers<[1], [0], [0], [1], [0, 0, 1, 1], [], []>} : vector<32x32xbf16>, vector<32x128xbf16>, vector<32x128xf32> -> vector<32x128xf32>
    %c0_3 = arith.constant 0 : index
    %c0_4 = arith.constant 0 : index
    %3 = vector.load %arg3[%c0_3, %c0_4] : memref<1x128xf32, #tpu.memory_space<vmem>>, vector<1x128xf32>
    %4 = vector.broadcast %3 : vector<1x128xf32> to vector<32x128xf32>
    %5 = arith.addf %2, %4 : vector<32x128xf32>
    %cst_5 = arith.constant 0.000000e+00 : f32
    %6 = vector.broadcast %cst_5 : f32 to vector<32x128xf32>
    %7 = arith.subf %6, %5 : vector<32x128xf32>
    %8 = math.exp %7 : vector<32x128xf32>
    %cst_6 = arith.constant 1.000000e+00 : f32
    %9 = vector.broadcast %cst_6 : f32 to vector<32x128xf32>
    %10 = arith.addf %9, %8 : vector<32x128xf32>
    %11 = tpu.reciprocal %10 {approx = true} : vector<32x128xf32> -> vector<32x128xf32>
    %c0_7 = arith.constant 0 : index
    %c0_8 = arith.constant 0 : index
    %12 = vector.load %arg4[%c0_7, %c0_8] : memref<32x128xf32, #tpu.memory_space<vmem>>, vector<32x128xf32>
    tpu.vector_store %arg4[%c0_7, %c0_8], %11 {strides = array<i32>} : memref<32x128xf32, #tpu.memory_space<vmem>>, vector<32x128xf32>,
    return
  }
  func.func @transform_0(%arg0: i32) -> (i32, i32) {
    %c0_i32 = arith.constant 0 : i32
    %c0_i32_0 = arith.constant 0 : i32
    return %arg0, %c0_i32 : i32, i32
  }
  func.func @transform_1(%arg0: i32) -> (i32, i32) {
    %c0_i32 = arith.constant 0 : i32
    %c0_i32_0 = arith.constant 0 : i32
    %c0_i32_1 = arith.constant 0 : i32
    return %c0_i32, %c0_i32_0 : i32, i32
  }
  func.func @transform_2(%arg0: i32) -> (i32, i32) {
    %c0_i32 = arith.constant 0 : i32
    %c0_i32_0 = arith.constant 0 : i32
    %c0_i32_1 = arith.constant 0 : i32
    return %c0_i32, %c0_i32_0 : i32, i32
  }
  func.func @transform_3(%arg0: i32) -> (i32, i32) {
    %c0_i32 = arith.constant 0 : i32
    %c0_i32_0 = arith.constant 0 : i32
    return %arg0, %c0_i32 : i32, i32
  }
}

</mosaic_0001>

<llo_original>
// kernel: decoder_forward.1
$region0: #{decoder_forward.1}
  #allocation0 [shape = 'u32[]', space=smem, size = 0x4, offset = 0x4, fixed_abs, tag = 'smem constant byte address 0x4 - core index']
  #allocation1 [shape = 'u32[72,128]{1,0:T(1,128)}', space=vmem, size = 0x9000, scoped, tag = 'internal scratch']
  %s0 = inlined_call_operand.vmem [shape: bf16[64,32], index: 0, kind: input, shape index: {}]
  %s1 = inlined_call_operand.vmem [shape: bf16[32,128], index: 1, kind: input, shape index: {}]
  %s2 = inlined_call_operand.vmem [shape: f32[1,128], index: 2, kind: input, shape index: {}]
  %s3 = inlined_call_operand.vmem [shape: f32[64,128], index: 3, kind: output, shape index: {}]
  %s4 = sld [smem:[#allocation0]]
  $region45: #{decoder_forward.1} parent=0
    _
  %s6 = ssub.s32 1, %s4
  %s7 = scalar_select 0, %s6, %s4
  loop: start=0, step=1, limit=4
  $region2: #{decoder_forward.1} parent=0 // loop_pre_header
    _
  $region3: #{decoder_forward.1} parent=0 // loop_header
    %s9 = sphi 0, %s13
    %p10 = scmp.ge.s32.totalorder %s9, 4
    %s19 = sphi 0, %s21
    %s22 = sphi 0, %s19
    %s23 = sphi 0, %s22
    %s39 = sphi 0, %s23
    %s43 = sphi 0, %s43
    %s45 = sphi 0, %s43
    %s46 = sphi 0, %s45
    %s60 = sphi 0, %s46
    %s64 = sphi 0, %s64
    %s66 = sphi 0, %s64
    %s67 = sphi 0, %s66
    %s81 = sphi 0, %s67
    %s87 = sphi 0, %s89
    %s90 = sphi 0, %s87
    %s91 = sphi 0, %s90
    %s107 = sphi 0, %s91
  $region4: #{decoder_forward.1} parent=0 // loop_header_branch
    %12 = sbr.rel (%p10) target = $region8
  $region5: #{decoder_forward.1} parent=0 // loop_body
    %s14 = ssub.s32 %s9, 1
    %s15 = ssub.s32 %s9, 2
    %s16 = sadd.s32 %s9, 1
    %s17 = ssub.s32 %s9, %s16
    %p18 = scmp.eq.s32.totalorder %s17, 0
    %s20 = sadd.s32 %s19, 1
    %s21 = scalar_select %p18, %s19, %s20
    %p24 = pneg %p18
    %p25 = scmp.eq.s32.totalorder %s9, 1
    %p26 = por %p24, %p25
    %p27 = scmp.ne.s32.totalorder %s19, %s22
    %p28 = scmp.eq.s32.totalorder %s9, 0
    %p29 = por %p27, %p28
    %p30 = scmp.ne.s32.totalorder %s19, %s22
    %p31 = scmp.eq.s32.totalorder %s14, 1
    %p32 = por %p30, %p31
    %p33 = scmp.ne.s32.totalorder %s22, %s23
    %p34 = scmp.eq.s32.totalorder %s14, 0
    %p35 = por %p33, %p34
    %p36 = scmp.ne.s32.totalorder %s22, %s23
    %p37 = scmp.eq.s32.totalorder %s15, 1
    %p38 = por %p36, %p37
    %p40 = scmp.ne.s32.totalorder %s23, %s39
    %p41 = scmp.eq.s32.totalorder %s15, 0
    %p42 = por %p40, %p41
    %s44 = sadd.s32 %s43, 1
    %p47 = scmp.eq.s32.totalorder %s9, 1
    %p48 = scmp.ne.s32.totalorder %s43, %s45
    %p49 = scmp.eq.s32.totalorder %s9, 0
    %p50 = por %p48, %p49
    %p51 = scmp.ne.s32.totalorder %s43, %s45
    %p52 = scmp.eq.s32.totalorder %s14, 1
    %p53 = por %p51, %p52
    %p54 = scmp.ne.s32.totalorder %s45, %s46
    %p55 = scmp.eq.s32.totalorder %s14, 0
    %p56 = por %p54, %p55
    %p57 = scmp.ne.s32.totalorder %s45, %s46
    %p58 = scmp.eq.s32.totalorder %s15, 1
    %p59 = por %p57, %p58
    %p61 = scmp.ne.s32.totalorder %s46, %s60
    %p62 = scmp.eq.s32.totalorder %s15, 0
    %p63 = por %p61, %p62
    %s65 = sadd.s32 %s64, 1
    %p68 = scmp.eq.s32.totalorder %s9, 1
    %p69 = scmp.ne.s32.totalorder %s64, %s66
    %p70 = scmp.eq.s32.totalorder %s9, 0
    %p71 = por %p69, %p70
    %p72 = scmp.ne.s32.totalorder %s64, %s66
    %p73 = scmp.eq.s32.totalorder %s14, 1
    %p74 = por %p72, %p73
    %p75 = scmp.ne.s32.totalorder %s66, %s67
    %p76 = scmp.eq.s32.totalorder %s14, 0
    %p77 = por %p75, %p76
    %p78 = scmp.ne.s32.totalorder %s66, %s67
    %p79 = scmp.eq.s32.totalorder %s15, 1
    %p80 = por %p78, %p79
    %p82 = scmp.ne.s32.totalorder %s67, %s81
    %p83 = scmp.eq.s32.totalorder %s15, 0
    %p84 = por %p82, %p83
    %s85 = ssub.s32 %s9, %s16
    %p86 = scmp.eq.s32.totalorder %s85, 0
    %s88 = sadd.s32 %s87, 1
    %s89 = scalar_select %p86, %s87, %s88
    %p92 = pneg %p86
    %p93 = scmp.eq.s32.totalorder %s9, 1
    %p94 = por %p92, %p93
    %p95 = scmp.ne.s32.totalorder %s87, %s90
    %p96 = scmp.eq.s32.totalorder %s9, 0
    %p97 = por %p95, %p96
    %p98 = scmp.ne.s32.totalorder %s87, %s90
    %p99 = scmp.eq.s32.totalorder %s14, 1
    %p100 = por %p98, %p99
    %p101 = scmp.ne.s32.totalorder %s90, %s91
    %p102 = scmp.eq.s32.totalorder %s14, 0
    %p103 = por %p101, %p102
    %p104 = scmp.ne.s32.totalorder %s90, %s91
    %p105 = scmp.eq.s32.totalorder %s15, 1
    %p106 = por %p104, %p105
    %p108 = scmp.ne.s32.totalorder %s91, %s107
    %p109 = scmp.eq.s32.totalorder %s15, 0
    %p110 = por %p108, %p109
    %p111 = scmp.le.s32.totalorder 1, %s9
    %p112 = scmp.lt.s32.totalorder %s9, 3
    %p113 = pnand %p111, %p112
    %p114 = pneg %p113
    // Predicated region
    $region9: #{decoder_forward.1} parent=5 // pred_check
      _
    $region10: #{decoder_forward.1} parent=5 // pred_check_branch
      %116 = sbr.rel (%p113) target = $region12
    $region11: #{decoder_forward.1} parent=5 // pred_region
      %s117 = ssub.s32 %s9, 1
      // Predicated region
      $region13: #{decoder_forward.1} parent=11 // pred_check
        %p118 = pneg %p56
      $region14: #{decoder_forward.1} parent=11 // pred_check_branch
        %120 = sbr.rel (%p118) target = $region16
      $region15: #{decoder_forward.1} parent=11 // pred_region
        _
      $region16: #{decoder_forward.1} parent=11 // pred_fallthru
        _
      // Predicated region
      $region17: #{decoder_forward.1} parent=11 // pred_check
        %p121 = pneg %p77
      $region18: #{decoder_forward.1} parent=11 // pred_check_branch
        %123 = sbr.rel (%p121) target = $region20
      $region19: #{decoder_forward.1} parent=11 // pred_region
        _
      $region20: #{decoder_forward.1} parent=11 // pred_fallthru
        _
    $region12: #{decoder_forward.1} parent=5 // pred_fallthru
      _
    %p124 = scmp.lt.s32.totalorder %s9, 2
    // Predicated region
    $region21: #{decoder_forward.1} parent=5 // pred_check
      %p125 = pneg %p124
    $region22: #{decoder_forward.1} parent=5 // pred_check_branch
      %127 = sbr.rel (%p125) target = $region24
    $region23: #{decoder_forward.1} parent=5 // pred_region
      // Predicated region
      $region25: #{decoder_forward.1} parent=23 // pred_check
        %p128 = pneg %p29
      $region26: #{decoder_forward.1} parent=23 // pred_check_branch
        %130 = sbr.rel (%p128) target = $region28
      $region27: #{decoder_forward.1} parent=23 // pred_region
        %s131 = smul.u32 4, %s9
        %p132 = scmp.lt.s32.totalorder %s131, 7
        %s133 = scalar_select %p132, %s131, 7
        %s134 = smul.addr %s133, 4
        %s135 = scalar_lea.vmem %s0, %s134
        %s136 = smul.u32 4, %s9
      $region28: #{decoder_forward.1} parent=23 // pred_fallthru
        _
    $region24: #{decoder_forward.1} parent=5 // pred_fallthru
      _
    %p137 = scmp.le.s32.totalorder 1, %s9
    %p138 = scmp.lt.s32.totalorder %s9, 3
    %p139 = pnand %p137, %p138
    %p140 = pneg %p139
    // Predicated region
    $region29: #{decoder_forward.1} parent=5 // pred_check
      _
    $region30: #{decoder_forward.1} parent=5 // pred_check_branch
      %142 = sbr.rel (%p139) target = $region32
    $region31: #{decoder_forward.1} parent=5 // pred_region
      %s143 = ssub.s32 %s9, 1
      %s144 = smul.u32 4, %s14
      %p145 = scmp.lt.s32.totalorder %s144, 7
      %s146 = scalar_select %p145, %s144, 7
      %s147 = smul.addr %s146, 4
      %s148 = scalar_lea.vmem %s0, %s147
      %p149 = pneg %p35
      %p150 = pneg %p32
      %p151 = pneg %p56
      %p152 = pneg %p53
      %p153 = pneg %p77
      %p154 = pneg %p74
      %p155 = pneg %p103
      %p156 = pneg %p100
      %s157 = smul.u32 4, %s14
      %p158 = scmp.lt.s32.totalorder %s157, 7
      %s159 = scalar_select %p158, %s157, 7
      %s160 = smul.addr %s159, 8
      %s161 = scalar_lea.vmem %s3, %s160
      %s162 = smul.u32 4, %s14
      %p163 = scmp.lt.s32.totalorder %s162, 7
      %s164 = scalar_select %p163, %s162, 7
      %s165 = smul.addr %s164, 4
      %s166 = scalar_lea.vmem %s0, %s165
      %s167 = smul.u32 4, %s14
      %s168 = smul.u32 4, %s14
      %p169 = scmp.lt.s32.totalorder %s168, 7
      %s170 = scalar_select %p169, %s168, 7
      %s171 = smul.addr %s170, 8
      %s172 = scalar_lea.vmem %s3, %s171
      %s173 = smul.u32 4, %s14
      %v175 = vld [vmem:[%s166] sm:$0xf]
      %v176 = vld [vmem:[%s166 + $0x4] sm:$0xf]
      %v177 = vld [vmem:[%s166 + $0x8] sm:$0xf]
      %v178 = vld [vmem:[%s166 + $0xc] sm:$0xf]
      %v179 = vld [vmem:[%s1] sm:$0xf]
      %v180 = vld [vmem:[%s1 + $0x4] sm:$0xf]
      %v181 = vld [vmem:[%s1 + $0x8] sm:$0xf]
      %v182 = vld [vmem:[%s1 + $0xc] sm:$0xf]
      %v183 = vld [vmem:[%s2] sm:$0x1]
      %v185 = vperm.slane %v183, 0
      %v191 = vunpack.c.l.b16 %v175
      %v192 = vunpack.c.l.b16 %v176
      %v193 = vunpack.c.l.b16 %v177
      %v194 = vunpack.c.l.b16 %v178
      %v195 = vpack.c.b16 %v192, %v191
      %v196 = vpack.c.b16 %v194, %v193
      %v201 = vunpack.c.l.b16 %v179
      %v202 = vunpack.c.l.b16 %v180
      %v203 = vunpack.c.l.b16 %v181
      %v204 = vunpack.c.l.b16 %v182
      %v205 = vpack.c.b16 %v202, %v201
      %v206 = vpack.c.b16 %v204, %v203
      %vm209 = vcmask 261120
      %v211 = vsel %vm209, %v195, 0
      %v214 = vsel %vm209, %v196, 0
      %216 = vmatpush.bf16.msra.mxu0 0
      %217 = vmatpush.bf16.msra.mxu0 0
      %218 = vmatpush.bf16.msra.mxu0 0
      %219 = vmatpush.bf16.msra.mxu0 0
      %220 = vmatpush.bf16.msra.mxu0 0
      %221 = vmatpush.bf16.msra.mxu0 0
      %222 = vmatpush.bf16.msra.mxu0 %v206
      %223 = vmatpush.bf16.msra.mxu0 %v205
      %224 = vmatmul.bf16.gmra.mxu0 %v211
      %v225 = vpop.f32.mrf.mxu0
      %v226 = vadd.f32 %v185, %v225
      %v227 = vpop.f32.mrf.mxu0
      %v228 = vadd.f32 %v185, %v227
      %229 = vmatmul.bf16.gmra.mxu0 %v214
      %v230 = vpop.f32.mrf.mxu0
      %v231 = vadd.f32 %v185, %v230
      %v232 = vpop.f32.mrf.mxu0
      %v233 = vadd.f32 %v185, %v232
      %234 = vdwg.mxu0
      %v235 = vsub.f32 0.0, %v226
      %v236 = vsub.f32 0.0, %v228
      %v237 = vsub.f32 0.0, %v231
      %v238 = vsub.f32 0.0, %v233
      %v239 = vmul.f32 %v235, 1.442695
      %v240 = vpow.pop %v239
      %v241 = vmul.f32 %v236, 1.442695
      %v242 = vpow.pop %v241
      %v243 = vmul.f32 %v237, 1.442695
      %v244 = vpow.pop %v243
      %v245 = vmul.f32 %v238, 1.442695
      %v246 = vpow.pop %v245
      %v247 = vadd.f32 %v240, 1.0
      %v248 = vadd.f32 %v242, 1.0
      %v249 = vadd.f32 %v244, 1.0
      %v250 = vadd.f32 %v246, 1.0
      %v251 = vrcp.pop %v247
      %v252 = vrcp.pop %v248
      %v253 = vrcp.pop %v249
      %v254 = vrcp.pop %v250
      %255 = vst [vmem:[%s172] sm:$0xff] %v251
      %256 = vst [vmem:[%s172 + $0x8] sm:$0xff] %v252
      %257 = vst [vmem:[%s172 + $0x10] sm:$0xff] %v253
      %258 = vst [vmem:[%s172 + $0x18] sm:$0xff] %v254
      %s259 = smul.u32 4, %s14
      %p260 = scmp.lt.s32.totalorder %s259, 7
      %s261 = scalar_select %p260, %s259, 7
      %s262 = smul.addr %s261, 8
      %s263 = scalar_lea.vmem %s3, %s262
      // Predicated region
      $region33: #{decoder_forward.1} parent=31 // pred_check
        %p264 = pneg %p100
      $region34: #{decoder_forward.1} parent=31 // pred_check_branch
        %266 = sbr.rel (%p264) target = $region36
      $region35: #{decoder_forward.1} parent=31 // pred_region
        %s267 = smul.u32 4, %s14
      $region36: #{decoder_forward.1} parent=31 // pred_fallthru
        _
    $region32: #{decoder_forward.1} parent=5 // pred_fallthru
      _
    %p268 = scmp.le.s32.totalorder 2, %s9
    // Predicated region
    $region37: #{decoder_forward.1} parent=5 // pred_check
      %p269 = pneg %p268
    $region38: #{decoder_forward.1} parent=5 // pred_check_branch
      %271 = sbr.rel (%p269) target = $region40
    $region39: #{decoder_forward.1} parent=5 // pred_region
      %s272 = ssub.s32 %s9, 2
      // Predicated region
      $region41: #{decoder_forward.1} parent=39 // pred_check
        %p273 = pneg %p106
      $region42: #{decoder_forward.1} parent=39 // pred_check_branch
        %275 = sbr.rel (%p273) target = $region44
      $region43: #{decoder_forward.1} parent=39 // pred_region
        %s276 = smul.u32 4, %s15
        %p277 = scmp.lt.s32.totalorder %s276, 7
        %s278 = scalar_select %p277, %s276, 7
        %s279 = smul.addr %s278, 8
        %s280 = scalar_lea.vmem %s3, %s279
      $region44: #{decoder_forward.1} parent=39 // pred_fallthru
        _
    $region40: #{decoder_forward.1} parent=5 // pred_fallthru
      _
  $region6: #{decoder_forward.1} parent=0 // loop_footer
    %s13 = sadd.s32 1, %s9
  $region7: #{decoder_forward.1} parent=0 // loop_footer_branch
    %8 = sbr.rel target = $region3
  $region8: #{decoder_forward.1} parent=0 // loop_exit
    _

</llo_original>
